<compile_context>
chip_gen: v5e
topology: v5e:2x2
jax: 0.10.0
libtpu: 0.0.40
codegen_flags: <defaults>
</compile_context>

<pallas_src>
import functools

import numpy as np
import jax
import jax.numpy as jnp
from jax.experimental import pallas as pl
from jax.experimental.pallas import tpu as pltpu

RAW_SENTINEL = 65535


# ----------------------------------------------------------------------------
# Host-side compression / decompression (mirrors CompressedLinear exactly).
# TODO(synk): dict-based variable-length codebook decoding stays on host; it
# has no clean Pallas equivalent and runs once at construction time.
# ----------------------------------------------------------------------------
def build_compressed_weight(flat_u8, sequence_length=4):
    """Build a compression table + compressed stream from a flat uint8 weight."""
    assert flat_u8.size % sequence_length == 0
    seqs = flat_u8.reshape(-1, sequence_length)
    table = {}
    next_code = 0
    seen = set()
    for row in seqs:
        t = tuple(int(v) for v in row)
        if t not in table and t not in seen:
            seen.add(t)
            if len(seen) % 2 == 1:  # every other unique sequence gets a codeword
                table[t] = next_code
                next_code += 1
    compressed = []
    for row in seqs:
        t = tuple(int(v) for v in row)
        if t in table:
            compressed.append(table[t])
        else:
            compressed.append(RAW_SENTINEL)
            compressed.extend(t)
    return table, np.array(compressed, dtype=np.int64)


def decompress_weights(compression_table, compressed_weight, out_features,
                       in_features, sequence_length=4):
    """Faithful port of CompressedLinear.decompress_weights."""
    decompression_table = {idx: seq for seq, idx in compression_table.items()}
    decompressed_weight = []
    compressed_data = compressed_weight
    i = 0
    while i < len(compressed_data):
        codeword = compressed_data[i]
        i += 1
        if codeword == RAW_SENTINEL:
            raw_values = compressed_data[i:i + sequence_length].astype(np.uint8)
            decompressed_weight.extend(raw_values)
            i += sequence_length
        else:
            sequence = decompression_table[codeword]
            decompressed_weight.extend(sequence)
    decompressed_weight = np.array(decompressed_weight, dtype=np.uint8)
    return decompressed_weight.astype(np.float32).reshape(out_features, in_features)


# ----------------------------------------------------------------------------
# Tiling helpers
# ----------------------------------------------------------------------------
def _round_up(x, m):
    return ((x + m - 1) // m) * m


def _pick_tile(padded_dim, preferred):
    """Largest multiple-of-128 divisor of padded_dim that is <= preferred.
    padded_dim is itself a multiple of 128, so 128 always divides."""
    best = 128
    t = 128
    while t <= padded_dim and t <= preferred:
        if padded_dim % t == 0:
            best = t
        t += 128
    return best


def _tile_footprint_bytes(tm, tn, tk, x_bytes, out_bytes):
    """VMEM footprint of one grid step with double-buffered operands."""
    return (2 * tm * tk * x_bytes      # x tile (double-buffered)
            + 2 * tk * tn * 1          # int8 weight tile (double-buffered)
            + 2 * 1 * tn * 4           # bias tile
            + 2 * tm * tn * out_bytes  # output tile
            + tm * tn * 4)             # f32 accumulator scratch


def _vmem_budget_bytes():
    """Generation-aware VMEM limit: ~96 MiB on v5e/v6e (128 MiB physical),
    ~48 MiB on v7x (64 MiB physical).  Falls back to the v7x-sized budget."""
    try:
        cap = pltpu.get_tpu_info().vmem_capacity_bytes
    except Exception:
        cap = 64 * 1024 * 1024
    return int(cap * 3 // 4)


# ----------------------------------------------------------------------------
# Kernels: y = x @ W^T + b   (x cast to bf16 in-kernel, W stored int8 in HBM
# and widened to bf16 in-kernel, accumulation f32, bias added in f32 epilogue)
# ----------------------------------------------------------------------------
def _widen_weight(w_ref):
    # int8 stored as (value - 128); undo the offset and widen to bf16 for the
    # MXU.  Integers 0..255 are exact in bf16, so this is lossless.
    return (w_ref[...].astype(jnp.float32) + 128.0).astype(jnp.bfloat16)


def _linear_kernel_single_pass(x_ref, w_ref, b_ref, o_ref):
    # Whole K stripe in one tile: no accumulator carry, single epilogue.
    x = x_ref[...].astype(jnp.bfloat16)
    acc = jnp.dot(x, _widen_weight(w_ref), preferred_element_type=jnp.float32)
    o_ref[...] = (acc + b_ref[...]).astype(o_ref.dtype)


def _linear_kernel_k_tiled(x_ref, w_ref, b_ref, o_ref, acc_ref):
    k = pl.program_id(2)

    @pl.when(k == 0)
    def _():
        acc_ref[...] = jnp.zeros_like(acc_ref)

    x = x_ref[...].astype(jnp.bfloat16)
    acc_ref[...] += jnp.dot(x, _widen_weight(w_ref),
                            preferred_element_type=jnp.float32)

    @pl.when(k == pl.num_programs(2) - 1)
    def _():
        # Bias added once in the f32 epilogue (correct under K-tiling).
        o_ref[...] = (acc_ref[...] + b_ref[...]).astype(o_ref.dtype)


@functools.lru_cache(maxsize=None)
def _build_linear_fn(Mp, Kp, Np, tm, tn, tk, x_dtype_name, out_dtype_name,
                     k_real, n_real, vmem_limit_bytes):
    x_dtype = jnp.dtype(x_dtype_name)
    out_dtype = jnp.dtype(out_dtype_name)
    nm, nn, nk = Mp // tm, Np // tn, Kp // tk

    # Truthful traffic estimate under this tiling (advisory for XLA scheduling):
    # W is streamed once per M block-row, x once per N block-column.
    cost = pl.CostEstimate(
        flops=2 * Mp * n_real * k_real,
        transcendentals=0,
        bytes_accessed=(Mp * Kp * x_dtype.itemsize * nn
                        + Kp * Np * 1 * nm
                        + Np * 4
                        + Mp * Np * out_dtype.itemsize),
    )

    if nk == 1:
        grid = (nm, nn)
        in_specs = [
            pl.BlockSpec((tm, tk), lambda i, j: (i, 0)),
            pl.BlockSpec((tk, tn), lambda i, j: (0, j)),
            pl.BlockSpec((1, tn), lambda i, j: (0, j)),
        ]
        out_specs = pl.BlockSpec((tm, tn), lambda i, j: (i, j))
        scratch_shapes = []
        kernel = _linear_kernel_single_pass
        dims = ("parallel", "parallel")
    else:
        grid = (nm, nn, nk)
        in_specs = [
            pl.BlockSpec((tm, tk), lambda i, j, k: (i, k)),
            pl.BlockSpec((tk, tn), lambda i, j, k: (k, j)),
            pl.BlockSpec((1, tn), lambda i, j, k: (0, j)),
        ]
        out_specs = pl.BlockSpec((tm, tn), lambda i, j, k: (i, j))
        scratch_shapes = [pltpu.VMEM((tm, tn), jnp.float32)]
        kernel = _linear_kernel_k_tiled
        dims = ("parallel", "parallel", "arbitrary")

    call = pl.pallas_call(
        kernel,
        out_shape=jax.ShapeDtypeStruct((Mp, Np), out_dtype),
        grid_spec=pltpu.PrefetchScalarGridSpec(
            num_scalar_prefetch=0,
            grid=grid,
            in_specs=in_specs,
            out_specs=out_specs,
            scratch_shapes=scratch_shapes,
        ),
        compiler_params=pltpu.CompilerParams(
            dimension_semantics=dims,
            vmem_limit_bytes=vmem_limit_bytes,
        ),
        cost_estimate=cost,
    )
    return jax.jit(call)


# ----------------------------------------------------------------------------
# Module wrapper: decompress / transpose / pad / upload ONCE at init.
# ----------------------------------------------------------------------------
class CompressedLinearPallas:
    def __init__(self, in_features, out_features, compression_table,
                 compressed_weight, bias=None, sequence_length=4,
                 tm=512, tn=1024, tk=2048, out_dtype=None):
        self.in_features = in_features
        self.out_features = out_features
        self.sequence_length = sequence_length
        self.out_dtype = out_dtype  # None -> match input dtype

        # 128-lane padding only (NOT tile-multiple padding).
        self.Kp = _round_up(in_features, 128)
        self.Np = _round_up(out_features, 128)

        # Generation-aware VMEM budget; shrink tile preferences until the
        # worst-case footprint fits (defaults ~18 MiB, fine even on v7x).
        self.vmem_limit = _vmem_budget_bytes()
        tile_budget = int(self.vmem_limit * 0.85)
        tm_pref, tn_pref, tk_pref = tm, tn, tk
        while True:
            tk_sel = _pick_tile(self.Kp, tk_pref)
            tn_sel = _pick_tile(self.Np, tn_pref)
            if _tile_footprint_bytes(tm_pref, tn_sel, tk_sel, 4, 4) <= tile_budget:
                break
            if tk_pref >= max(tm_pref, tn_pref) and tk_pref > 128:
                tk_pref //= 2
            elif tn_pref >= tm_pref and tn_pref > 128:
                tn_pref //= 2
            elif tm_pref > 128:
                tm_pref //= 2
            else:
                break
        self.tk = tk_sel
        self.tn = tn_sel
        self.tm_pref = tm_pref

        # v7x has 2 TensorCores: give the (parallel) N axis >=2 blocks when the
        # layer is wide enough so grid=(1,1,...) configs still use both cores.
        if self.out_features >= 256 and self.Np // self.tn < 2:
            self.tn = _pick_tile(self.Np, max(128, self.Np // 2))

        # Hoisted: decompress once on host, transpose to (K, N), pad to 128
        # lanes, store as int8 (value - 128) so HBM weight traffic is 1 B/elem.
        w_np = decompress_weights(compression_table, compressed_weight,
                                  out_features, in_features, sequence_length)
        w_i8 = np.full((self.Kp, self.Np), -128, dtype=np.int8)  # pads -> 0 weight
        w_i8[:in_features, :out_features] = (
            w_np.T.astype(np.int32) - 128).astype(np.int8)
        self.w_i8 = jnp.asarray(w_i8)

        b_pad = np.zeros((1, self.Np), dtype=np.float32)
        if bias is not None:
            b_pad[0, :out_features] = np.asarray(bias, dtype=np.float32)
        self.b_pad = jnp.asarray(b_pad)

    def __call__(self, x):
        lead_shape = x.shape[:-1]
        x2d = x.reshape(-1, self.in_features)
        M = x2d.shape[0]
        out_dtype = (jnp.dtype(self.out_dtype) if self.out_dtype is not None
                     else x2d.dtype)

        if M <= 128:
            # Decode-style small batch: pad rows only to the 16-row sublane
            # multiple (not 128) - buckets M and avoids 8x wasted MXU passes.
            tm = _round_up(max(M, 1), 16)
            Mp = tm
        else:
            Mp = _round_up(M, 128)
            tm = _pick_tile(Mp, self.tm_pref)

        pad_m = Mp - M
        pad_k = self.Kp - self.in_features
        if pad_m or pad_k:
            x2d = jnp.pad(x2d, ((0, pad_m), (0, pad_k)))
        # No wrapper-side astype: the x tile is cast to bf16 inside the kernel.

        fn = _build_linear_fn(Mp, self.Kp, self.Np, tm, self.tn, self.tk,
                              x2d.dtype.name, out_dtype.name,
                              self.in_features, self.out_features,
                              self.vmem_limit)
        y = fn(x2d, self.w_i8, self.b_pad)
        if Mp != M or self.Np != self.out_features:
            y = y[:M, :self.out_features]
        return y.reshape(*lead_shape, self.out_features)


# ----------------------------------------------------------------------------
# Self-test
# ----------------------------------------------------------------------------
def _reference(x, w_dec, bias):
    # Matches the kernel's bf16 activation operand (weights are integer-valued,
    # hence exact in bf16); accumulation is f32 in both.
    x_bf = x.astype(jnp.bfloat16).astype(jnp.float32)
    ref = jnp.einsum("...i,oi->...o", x_bf, jnp.asarray(w_dec))
    if bias is not None:
        ref = ref + jnp.asarray(bias)
    return ref


if __name__ == "__main__":
    key = jax.random.PRNGKey(0)
    k1, k2, k3, k4, k5, k6 = jax.random.split(key, 6)

    # --- Test 1: tiny layer (single-pass kernel, small-M path) ---------------
    in_f, out_f, batch, seq, seq_len = 32, 16, 2, 8, 4
    w_u8 = np.asarray(jax.random.randint(k1, (out_f * in_f,), 0, 8,
                                         dtype=jnp.int32)).astype(np.uint8)
    table, compressed = build_compressed_weight(w_u8, seq_len)
    w_dec = decompress_weights(table, compressed, out_f, in_f, seq_len)
    assert np.array_equal(w_dec, w_u8.astype(np.float32).reshape(out_f, in_f))

    bias = np.asarray(jax.random.normal(k2, (out_f,), dtype=jnp.float32))
    x = jax.random.normal(k3, (batch, seq, in_f), dtype=jnp.float32)

    mod = CompressedLinearPallas(in_f, out_f, table, compressed, bias=bias,
                                 sequence_length=seq_len)
    y = jax.block_until_ready(mod(x))
    assert y.shape == (batch, seq, out_f) and y.dtype == x.dtype
    np.testing.assert_allclose(np.asarray(y),
                               np.asarray(_reference(x, w_dec, bias)),
                               rtol=1e-4, atol=1e-4)

    # --- Test 2: larger layer with tk forced below K to exercise the K-tiled
    #     accumulator path (grid = (1, 1, 2)) --------------------------------
    in_f2, out_f2, batch2, seq2 = 256, 128, 2, 16
    w_u8_2 = np.asarray(jax.random.randint(k4, (out_f2 * in_f2,), 0, 8,
                                           dtype=jnp.int32)).astype(np.uint8)
    table2, compressed2 = build_compressed_weight(w_u8_2, seq_len)
    w_dec2 = decompress_weights(table2, compressed2, out_f2, in_f2, seq_len)
    bias2 = np.asarray(jax.random.normal(k5, (out_f2,), dtype=jnp.float32))
    x2 = jax.random.normal(k6, (batch2, seq2, in_f2), dtype=jnp.float32)

    mod2 = CompressedLinearPallas(in_f2, out_f2, table2, compressed2,
                                  bias=bias2, sequence_length=seq_len, tk=128)
    y2 = jax.block_until_ready(mod2(x2))
    assert y2.shape == (batch2, seq2, out_f2)
    np.testing.assert_allclose(np.asarray(y2),
                               np.asarray(_reference(x2, w_dec2, bias2)),
                               rtol=1e-3, atol=1e-2)

    print("KERNEL_OK")
</pallas_src>

<mosaic_0001>
module attributes {stable_mosaic.version = 11 : i64} {
  func.func @_linear_kernel_single_pass(%arg0: i32, %arg1: i32, %arg2: memref<16x128xf32, #tpu.memory_space<vmem>>, %arg3: memref<128x128xi8, #tpu.memory_space<vmem>>, %arg4: memref<1x128xf32, #tpu.memory_space<vmem>>, %arg5: memref<16x128xf32, #tpu.memory_space<vmem>>) attributes {dimension_semantics = [#tpu.dimension_semantics<parallel>, #tpu.dimension_semantics<parallel>], iteration_bounds = array<i64: 1, 1>, scalar_prefetch = 0 : i64, scratch_operands = 0 : i64, tpu.core_type = #tpu.core_type<tc>, window_params = [{transform_indices = @transform_0, window_bounds = array<i64: 16, 128>}, {transform_indices = @transform_1, window_bounds = array<i64: 128, 128>}, {transform_indices = @transform_2, window_bounds = array<i64: 1, 128>}, {transform_indices = @transform_3, window_bounds = array<i64: 16, 128>}]} {
    %c0 = arith.constant 0 : index
    %c0_0 = arith.constant 0 : index
    %0 = vector.load %arg2[%c0, %c0_0] : memref<16x128xf32, #tpu.memory_space<vmem>>, vector<16x128xf32>
    %1 = arith.truncf %0 : vector<16x128xf32> to vector<16x128xbf16>
    %c0_1 = arith.constant 0 : index
    %c0_2 = arith.constant 0 : index
    %2 = vector.load %arg3[%c0_1, %c0_2] : memref<128x128xi8, #tpu.memory_space<vmem>>, vector<128x128xi8>
    %3 = arith.sitofp %2 : vector<128x128xi8> to vector<128x128xf32>
    %cst = arith.constant 1.280000e+02 : f32
    %4 = vector.broadcast %cst : f32 to vector<128x128xf32>
    %5 = arith.addf %3, %4 : vector<128x128xf32>
    %6 = arith.truncf %5 : vector<128x128xf32> to vector<128x128xbf16>
    %cst_3 = arith.constant dense<0.000000e+00> : vector<16x128xf32>
    %7 = tpu.matmul %1, %6, %cst_3 {dimension_numbers = #tpu.dot_dimension_numbers<[1], [0], [0], [1], [0, 0, 1, 1], [], []>} : vector<16x128xbf16>, vector<128x128xbf16>, vector<16x128xf32> -> vector<16x128xf32>
    %c0_4 = arith.constant 0 : index
    %c0_5 = arith.constant 0 : index
    %8 = vector.load %arg4[%c0_4, %c0_5] : memref<1x128xf32, #tpu.memory_space<vmem>>, vector<1x128xf32>
    %9 = vector.broadcast %8 : vector<1x128xf32> to vector<16x128xf32>
    %10 = arith.addf %7, %9 : vector<16x128xf32>
    %c0_6 = arith.constant 0 : index
    %c0_7 = arith.constant 0 : index
    %11 = vector.load %arg5[%c0_6, %c0_7] : memref<16x128xf32, #tpu.memory_space<vmem>>, vector<16x128xf32>
    tpu.vector_store %arg5[%c0_6, %c0_7], %10 {strides = array<i32>} : memref<16x128xf32, #tpu.memory_space<vmem>>, vector<16x128xf32>,
    return
  }
  func.func @transform_0(%arg0: i32, %arg1: i32) -> (i32, i32) {
    %c0_i32 = arith.constant 0 : i32
    %c0_i32_0 = arith.constant 0 : i32
    return %arg0, %c0_i32 : i32, i32
  }
  func.func @transform_1(%arg0: i32, %arg1: i32) -> (i32, i32) {
    %c0_i32 = arith.constant 0 : i32
    %c0_i32_0 = arith.constant 0 : i32
    return %c0_i32, %arg1 : i32, i32
  }
  func.func @transform_2(%arg0: i32, %arg1: i32) -> (i32, i32) {
    %c0_i32 = arith.constant 0 : i32
    %c0_i32_0 = arith.constant 0 : i32
    return %c0_i32, %arg1 : i32, i32
  }
  func.func @transform_3(%arg0: i32, %arg1: i32) -> (i32, i32) {
    %c0_i32 = arith.constant 0 : i32
    return %arg0, %arg1 : i32, i32
  }
}

</mosaic_0001>

<llo_original>
// kernel: tpu_custom_call.1
$region0: #{tpu_custom_call.1}
  #allocation0 [shape = 'u32[]', space=smem, size = 0x4, offset = 0x4, fixed_abs, tag = 'smem constant byte address 0x4 - core index']
  #allocation1 [shape = 'u32[72,128]{1,0:T(1,128)}', space=vmem, size = 0x9000, scoped, tag = 'internal scratch']
  %s0 = inlined_call_operand.hbm [shape: f32[16,128], index: 0, kind: input, shape index: {}]
  %s1 = inlined_call_operand.hbm [shape: s8[128,128], index: 1, kind: input, shape index: {}]
  %s2 = inlined_call_operand.vmem [shape: f32[1,128], index: 2, kind: input, shape index: {}]
  %s3 = inlined_call_operand.hbm [shape: f32[16,128], index: 3, kind: output, shape index: {}]
  %s4 = sld [smem:[#allocation0]]
  $region30: #{tpu_custom_call.1} parent=0
    _
  %s6 = ssub.s32 1, %s4
  %s7 = scalar_select 0, %s6, %s4
  $region1: #{tpu_custom_call.1} parent=0
    #allocation2 [shape = 'u8[8192]{0}', space=vmem, size = 0x2000, scoped, tag = 'input window, operand 0, single buffered']
    #allocation3 [shape = 's32[1]{0}', space=sflag, size = 0x4, scoped, tag = 'scoped memory for tpu_custom_call.1']
    #allocation4 [shape = 's32[1]{0}', space=sflag, size = 0x4, scoped, tag = 'scoped memory for tpu_custom_call.1']
    #allocation5 [shape = 'u8[16384]{0}', space=vmem, size = 0x4000, scoped, tag = 'input window, operand 1, single buffered']
    #allocation6 [shape = 's32[1]{0}', space=sflag, size = 0x4, scoped, tag = 'scoped memory for tpu_custom_call.1']
    #allocation7 [shape = 'u8[8192]{0}', space=vmem, size = 0x2000, scoped, tag = 'output window, operand 0, single buffered']
    %8 = vsyncpa [#allocation3], 0
    %9 = vsyncpa [#allocation6], 0
    %10 = vsyncpa [#allocation4], 0
    // Predicated region
    $region2: #{tpu_custom_call.1} parent=1 // pred_check
      _
    $region3: #{tpu_custom_call.1} parent=1 // pred_check_branch
      %12 = sbr.rel (0) target = $region5
    $region4: #{tpu_custom_call.1} parent=1 // pred_region
      %14 = vsyncadd [#allocation3], 0
      %s15 = sshll.u32 %s0, 4
      %s16 = int_to_ptr.hbm [resolvable:$true] %s15
      %s17 = sshll.u32 [#allocation2], 4
      %s18 = int_to_ptr.vmem [resolvable:$true] %s17
      %23 = dma.hbm_to_vmem [thread:$0]  %s16, 256, %s18, [#allocation3], 128, 128, 8
    $region5: #{tpu_custom_call.1} parent=1 // pred_fallthru
      _
    // Predicated region
    $region6: #{tpu_custom_call.1} parent=1 // pred_check
      _
    $region7: #{tpu_custom_call.1} parent=1 // pred_check_branch
      %25 = sbr.rel (0) target = $region9
    $region8: #{tpu_custom_call.1} parent=1 // pred_region
      %27 = vsyncadd [#allocation6], 0
      %s28 = sshll.u32 %s1, 4
      %s29 = int_to_ptr.hbm [resolvable:$true] %s28
      %s30 = sshll.u32 [#allocation5], 4
      %s31 = int_to_ptr.vmem [resolvable:$true] %s30
      %36 = dma.hbm_to_vmem [thread:$0]  %s29, 512, %s31, [#allocation6], 128, 128, 8
    $region9: #{tpu_custom_call.1} parent=1 // pred_fallthru
      _
    // Predicated region
    $region10: #{tpu_custom_call.1} parent=1 // pred_check
      _
    $region11: #{tpu_custom_call.1} parent=1 // pred_check_branch
      %38 = sbr.rel (0) target = $region13
    $region12: #{tpu_custom_call.1} parent=1 // pred_region
      _
    $region13: #{tpu_custom_call.1} parent=1 // pred_fallthru
      _
    // Predicated region
    $region14: #{tpu_custom_call.1} parent=1 // pred_check
      _
    $region15: #{tpu_custom_call.1} parent=1 // pred_check_branch
      %40 = sbr.rel (0) target = $region17
    $region16: #{tpu_custom_call.1} parent=1 // pred_region
      %42 = dma.done [#allocation3], 256
    $region17: #{tpu_custom_call.1} parent=1 // pred_fallthru
      _
    // Predicated region
    $region18: #{tpu_custom_call.1} parent=1 // pred_check
      _
    $region19: #{tpu_custom_call.1} parent=1 // pred_check_branch
      %44 = sbr.rel (0) target = $region21
    $region20: #{tpu_custom_call.1} parent=1 // pred_region
      %46 = dma.done [#allocation6], 512
    $region21: #{tpu_custom_call.1} parent=1 // pred_fallthru
      _
    %v47 = vld [vmem:[#allocation2] sm:$0xff]
    %v48 = vld [vmem:[#allocation2 + $0x8] sm:$0xff]
    %v49 = vpack.c.bf16 %v48, %v47
    %v50 = vld [vmem:[#allocation5] sm:$0xff]
    %v51 = vld [vmem:[#allocation5 + $0x8] sm:$0xff]
    %v52 = vld [vmem:[#allocation5 + $0x10] sm:$0xff]
    %v53 = vld [vmem:[#allocation5 + $0x18] sm:$0xff]
    %v54 = vunpack.c.0.s8 %v50
    %v55 = vunpack.c.1.s8 %v50
    %v56 = vunpack.c.2.s8 %v50
    %v57 = vunpack.c.3.s8 %v50
    %v58 = vunpack.c.0.s8 %v51
    %v59 = vunpack.c.1.s8 %v51
    %v60 = vunpack.c.2.s8 %v51
    %v61 = vunpack.c.3.s8 %v51
    %v62 = vunpack.c.0.s8 %v52
    %v63 = vunpack.c.1.s8 %v52
    %v64 = vunpack.c.2.s8 %v52
    %v65 = vunpack.c.3.s8 %v52
    %v66 = vunpack.c.0.s8 %v53
    %v67 = vunpack.c.1.s8 %v53
    %v68 = vunpack.c.2.s8 %v53
    %v69 = vunpack.c.3.s8 %v53
    %v70 = vcvt.s32.f32 %v54
    %v71 = vcvt.s32.f32 %v55
    %v72 = vcvt.s32.f32 %v56
    %v73 = vcvt.s32.f32 %v57
    %v74 = vcvt.s32.f32 %v58
    %v75 = vcvt.s32.f32 %v59
    %v76 = vcvt.s32.f32 %v60
    %v77 = vcvt.s32.f32 %v61
    %v78 = vcvt.s32.f32 %v62
    %v79 = vcvt.s32.f32 %v63
    %v80 = vcvt.s32.f32 %v64
    %v81 = vcvt.s32.f32 %v65
    %v82 = vcvt.s32.f32 %v66
    %v83 = vcvt.s32.f32 %v67
    %v84 = vcvt.s32.f32 %v68
    %v85 = vcvt.s32.f32 %v69
    %v86 = vadd.f32 %v70, 128.0
    %v87 = vadd.f32 %v71, 128.0
    %v88 = vadd.f32 %v72, 128.0
    %v89 = vadd.f32 %v73, 128.0
    %v90 = vadd.f32 %v74, 128.0
    %v91 = vadd.f32 %v75, 128.0
    %v92 = vadd.f32 %v76, 128.0
    %v93 = vadd.f32 %v77, 128.0
    %v94 = vadd.f32 %v78, 128.0
    %v95 = vadd.f32 %v79, 128.0
    %v96 = vadd.f32 %v80, 128.0
    %v97 = vadd.f32 %v81, 128.0
    %v98 = vadd.f32 %v82, 128.0
    %v99 = vadd.f32 %v83, 128.0
    %v100 = vadd.f32 %v84, 128.0
    %v101 = vadd.f32 %v85, 128.0
    %v102 = vpack.c.bf16 %v87, %v86
    %v103 = vpack.c.bf16 %v89, %v88
    %v104 = vpack.c.bf16 %v91, %v90
    %v105 = vpack.c.bf16 %v93, %v92
    %v106 = vpack.c.bf16 %v95, %v94
    %v107 = vpack.c.bf16 %v97, %v96
    %v108 = vpack.c.bf16 %v99, %v98
    %v109 = vpack.c.bf16 %v101, %v100
    %v110 = vld [vmem:[%s2] sm:$0x1]
    %v112 = vperm.slane %v110, 0
    %114 = vmatpush.bf16.msra.mxu0 %v109
    %115 = vmatpush.bf16.msra.mxu0 %v108
    %116 = vmatpush.bf16.msra.mxu0 %v107
    %117 = vmatpush.bf16.msra.mxu0 %v106
    %118 = vmatpush.bf16.msra.mxu0 %v105
    %119 = vmatpush.bf16.msra.mxu0 %v104
    %120 = vmatpush.bf16.msra.mxu0 %v103
    %121 = vmatpush.bf16.msra.mxu0 %v102
    %122 = vmatmul.bf16.gmra.mxu0 %v49
    %v123 = vpop.f32.mrf.mxu0
    %v124 = vadd.f32 %v112, %v123
    %v125 = vpop.f32.mrf.mxu0
    %v126 = vadd.f32 %v112, %v125
    %127 = vdwg.mxu0
    %128 = vst [vmem:[#allocation7] sm:$0xff] %v124
    %129 = vst [vmem:[#allocation7 + $0x8] sm:$0xff] %v126
    // Predicated region
    $region22: #{tpu_custom_call.1} parent=1 // pred_check
      _
    $region23: #{tpu_custom_call.1} parent=1 // pred_check_branch
      %131 = sbr.rel (0) target = $region25
    $region24: #{tpu_custom_call.1} parent=1 // pred_region
      %133 = vsyncadd [#allocation4], 0
      %s134 = sshll.u32 [#allocation7], 4
      %s135 = int_to_ptr.vmem [resolvable:$true] %s134
      %s136 = sshll.u32 %s3, 4
      %s137 = int_to_ptr.hbm [resolvable:$true] %s136
      %142 = dma.vmem_to_hbm [thread:$0]  %s135, 256, %s137, [#allocation4], 128, 128, 8
    $region25: #{tpu_custom_call.1} parent=1 // pred_fallthru
      _
    // Predicated region
    $region26: #{tpu_custom_call.1} parent=1 // pred_check
      _
    $region27: #{tpu_custom_call.1} parent=1 // pred_check_branch
      %144 = sbr.rel (0) target = $region29
    $region28: #{tpu_custom_call.1} parent=1 // pred_region
      %146 = dma.done [#allocation4], 256
    $region29: #{tpu_custom_call.1} parent=1 // pred_fallthru
      _
    %147 = vsyncpa [#allocation3], 1
    %148 = vsyncpa [#allocation6], 1
    %149 = vsyncpa [#allocation4], 1

</llo_original>
